<compile_context>
chip_gen: v6e
topology: v6e:2x2x1
jax: 0.10.0
libtpu: 0.0.40
codegen_flags: <defaults>
</compile_context>

<pallas_src>
import jax
import jax.numpy as jnp
from jax.experimental import pallas as pl
from jax.experimental.pallas import tpu as pltpu

IN_DIM = 784
HID_DIM = 32


def autoencoder_kernel(x_ref, w1_ref, b1_ref, w2_ref, b2_ref, o_ref):
    x = x_ref[...]
    # Encoder: Linear(784 -> 32) + ReLU. MXU matmul, f32 accumulation.
    h = jnp.dot(x, w1_ref[...], preferred_element_type=jnp.float32)
    h = jnp.maximum(h + b1_ref[...], 0.0)            # b1 is (1, 32)
    # Decoder: Linear(32 -> 784).
    y = jnp.dot(h.astype(w2_ref.dtype), w2_ref[...],
                preferred_element_type=jnp.float32)
    y = y + b2_ref[...]                               # b2 is (1, 784)
    # Exact sigmoid with a single EUP transcendental per element:
    #   sigmoid(y) = 0.5 * tanh(0.5 * y) + 0.5
    o = 0.5 * jnp.tanh(0.5 * y) + 0.5
    o_ref[...] = o.astype(o_ref.dtype)


def _select_batch_tile(B, tb):
    """Choose the batch tile.

    - Tiny batches (<= 64 rows): a single full block.
    - Otherwise: at least two grid steps (so both v7x TensorCores get work
      under dimension_semantics=("parallel",)), rounded down to a multiple of
      32 rows so bf16/int8 packed sublane tiles stay unmasked.
    """
    if B <= 64:
        return B
    tb = min(tb, -(-B // 2))           # ceil(B/2): guarantees >= 2 grid steps
    tb = max(32, (tb // 32) * 32)      # 32-row alignment for packed dtypes
    return tb


def autoencoder_forward(x, w1, b1, w2, b2, *, tb=2048):
    """y = sigmoid(relu(x @ w1 + b1) @ w2 + b2), batch-tiled Pallas kernel.

    Kernel is HBM-bandwidth bound (~16 FLOP/byte at f32): we stream x in and
    the reconstruction out in large batch tiles while the tiny weights stay
    VMEM-resident for the whole grid.
    """
    B = x.shape[0]
    tb = _select_batch_tile(B, tb)
    grid = (pl.cdiv(B, tb),)

    x_bytes = jnp.dtype(x.dtype).itemsize
    w_bytes = jnp.dtype(w1.dtype).itemsize
    cost = pl.CostEstimate(
        flops=2 * 2 * B * IN_DIM * HID_DIM,              # two matmuls
        transcendentals=B * IN_DIM,                      # one tanh per output
        bytes_accessed=(B * IN_DIM * 2 * x_bytes         # stream x in, y out
                        + (2 * IN_DIM * HID_DIM + IN_DIM + HID_DIM) * w_bytes),
    )

    return pl.pallas_call(
        autoencoder_kernel,
        out_shape=jax.ShapeDtypeStruct((B, IN_DIM), x.dtype),
        grid=grid,
        in_specs=[
            pl.BlockSpec((tb, IN_DIM), lambda i: (i, 0)),       # x: batch-tiled
            pl.BlockSpec((IN_DIM, HID_DIM), lambda i: (0, 0)),  # w1: resident
            pl.BlockSpec((1, HID_DIM), lambda i: (0, 0)),       # b1: resident
            pl.BlockSpec((HID_DIM, IN_DIM), lambda i: (0, 0)),  # w2: resident
            pl.BlockSpec((1, IN_DIM), lambda i: (0, 0)),        # b2: resident
        ],
        out_specs=pl.BlockSpec((tb, IN_DIM), lambda i: (i, 0)),
        compiler_params=pltpu.CompilerParams(
            dimension_semantics=("parallel",),   # megacore sharding on v7x
            vmem_limit_bytes=48 * 1024 * 1024,   # raises v5e default, < v7x 64MiB
        ),
        cost_estimate=cost,
    )(x, w1, b1, w2, b2)


def init_params(key):
    """Deterministic init mimicking torch.nn.Linear (uniform +-1/sqrt(fan_in))."""
    k1, k2, k3, k4 = jax.random.split(key, 4)
    bound1 = 1.0 / jnp.sqrt(jnp.float32(IN_DIM))
    bound2 = 1.0 / jnp.sqrt(jnp.float32(HID_DIM))
    w1 = jax.random.uniform(k1, (IN_DIM, HID_DIM), jnp.float32, -bound1, bound1)
    b1 = jax.random.uniform(k2, (1, HID_DIM), jnp.float32, -bound1, bound1)
    w2 = jax.random.uniform(k3, (HID_DIM, IN_DIM), jnp.float32, -bound2, bound2)
    b2 = jax.random.uniform(k4, (1, IN_DIM), jnp.float32, -bound2, bound2)
    return w1, b1, w2, b2


def reference_forward(x, w1, b1, w2, b2):
    h = jnp.maximum(x @ w1 + b1, 0.0)
    return jax.nn.sigmoid(h @ w2 + b2)


if __name__ == "__main__":
    key = jax.random.PRNGKey(0)
    kx, kp = jax.random.split(key)
    w1, b1, w2, b2 = init_params(kp)

    # Small batch (single-tile path), like flattened 28x28 MNIST images.
    B0 = 8
    x0 = jax.random.uniform(kx, (B0, IN_DIM), jnp.float32)
    out0 = jax.block_until_ready(autoencoder_forward(x0, w1, b1, w2, b2))
    ref0 = reference_forward(x0, w1, b1, w2, b2)
    assert out0.shape == (B0, IN_DIM)
    assert jnp.allclose(out0, ref0, atol=5e-3, rtol=0)

    # Medium batch: exercises >= 2 grid steps (megacore path) and a partial
    # final block (masked output writes).
    B1 = 300
    x1 = jax.random.uniform(jax.random.fold_in(kx, 1), (B1, IN_DIM), jnp.float32)
    out1 = jax.block_until_ready(autoencoder_forward(x1, w1, b1, w2, b2))
    ref1 = reference_forward(x1, w1, b1, w2, b2)
    assert out1.shape == (B1, IN_DIM)
    assert jnp.allclose(out1, ref1, atol=5e-3, rtol=0)

    # bf16 streaming path (halves HBM bytes); accumulation stays f32 in-kernel.
    outb = jax.block_until_ready(
        autoencoder_forward(
            x1.astype(jnp.bfloat16),
            w1.astype(jnp.bfloat16), b1.astype(jnp.bfloat16),
            w2.astype(jnp.bfloat16), b2.astype(jnp.bfloat16)))
    assert outb.dtype == jnp.bfloat16
    assert jnp.allclose(outb.astype(jnp.float32), ref1, atol=3e-2, rtol=0)

    print("KERNEL_OK")
</pallas_src>

<mosaic_0001>
module attributes {stable_mosaic.version = 11 : i64} {
  func.func @autoencoder_kernel(%arg0: i32, %arg1: memref<8x784xf32, #tpu.memory_space<vmem>>, %arg2: memref<784x32xf32, #tpu.memory_space<vmem>>, %arg3: memref<1x32xf32, #tpu.memory_space<vmem>>, %arg4: memref<32x784xf32, #tpu.memory_space<vmem>>, %arg5: memref<1x784xf32, #tpu.memory_space<vmem>>, %arg6: memref<8x784xf32, #tpu.memory_space<vmem>>) attributes {dimension_semantics = [#tpu.dimension_semantics<parallel>], iteration_bounds = array<i64: 1>, scalar_prefetch = 0 : i64, scratch_operands = 0 : i64, tpu.core_type = #tpu.core_type<tc>, window_params = [{transform_indices = @transform_0, window_bounds = array<i64: 8, 784>}, {pipeline_mode = #tpu.pipeline_mode<synchronous>, transform_indices = @transform_1, window_bounds = array<i64: 784, 32>}, {pipeline_mode = #tpu.pipeline_mode<synchronous>, transform_indices = @transform_2, window_bounds = array<i64: 1, 32>}, {pipeline_mode = #tpu.pipeline_mode<synchronous>, transform_indices = @transform_3, window_bounds = array<i64: 32, 784>}, {pipeline_mode = #tpu.pipeline_mode<synchronous>, transform_indices = @transform_4, window_bounds = array<i64: 1, 784>}, {transform_indices = @transform_5, window_bounds = array<i64: 8, 784>}]} {
    %c0 = arith.constant 0 : index
    %c0_0 = arith.constant 0 : index
    %0 = vector.load %arg1[%c0, %c0_0] : memref<8x784xf32, #tpu.memory_space<vmem>>, vector<8x784xf32>
    %c0_1 = arith.constant 0 : index
    %c0_2 = arith.constant 0 : index
    %1 = vector.load %arg2[%c0_1, %c0_2] : memref<784x32xf32, #tpu.memory_space<vmem>>, vector<784x32xf32>
    %cst = arith.constant dense<0.000000e+00> : vector<8x32xf32>
    %2 = tpu.matmul %0, %1, %cst {dimension_numbers = #tpu.dot_dimension_numbers<[1], [0], [0], [1], [0, 0, 1, 1], [], []>} : vector<8x784xf32>, vector<784x32xf32>, vector<8x32xf32> -> vector<8x32xf32>
    %c0_3 = arith.constant 0 : index
    %c0_4 = arith.constant 0 : index
    %3 = vector.load %arg3[%c0_3, %c0_4] : memref<1x32xf32, #tpu.memory_space<vmem>>, vector<1x32xf32>
    %4 = vector.broadcast %3 : vector<1x32xf32> to vector<8x32xf32>
    %5 = arith.addf %2, %4 : vector<8x32xf32>
    %cst_5 = arith.constant 0.000000e+00 : f32
    %6 = vector.broadcast %cst_5 : f32 to vector<8x32xf32>
    %7 = arith.maximumf %5, %6 : vector<8x32xf32>
    %c0_6 = arith.constant 0 : index
    %c0_7 = arith.constant 0 : index
    %8 = vector.load %arg4[%c0_6, %c0_7] : memref<32x784xf32, #tpu.memory_space<vmem>>, vector<32x784xf32>
    %cst_8 = arith.constant dense<0.000000e+00> : vector<8x784xf32>
    %9 = tpu.matmul %7, %8, %cst_8 {dimension_numbers = #tpu.dot_dimension_numbers<[1], [0], [0], [1], [0, 0, 1, 1], [], []>} : vector<8x32xf32>, vector<32x784xf32>, vector<8x784xf32> -> vector<8x784xf32>
    %c0_9 = arith.constant 0 : index
    %c0_10 = arith.constant 0 : index
    %10 = vector.load %arg5[%c0_9, %c0_10] : memref<1x784xf32, #tpu.memory_space<vmem>>, vector<1x784xf32>
    %11 = vector.broadcast %10 : vector<1x784xf32> to vector<8x784xf32>
    %12 = arith.addf %9, %11 : vector<8x784xf32>
    %cst_11 = arith.constant 5.000000e-01 : f32
    %13 = vector.broadcast %cst_11 : f32 to vector<8x784xf32>
    %14 = arith.mulf %13, %12 : vector<8x784xf32>
    %15 = math.tanh %14 : vector<8x784xf32>
    %cst_12 = arith.constant 5.000000e-01 : f32
    %16 = vector.broadcast %cst_12 : f32 to vector<8x784xf32>
    %17 = arith.mulf %16, %15 : vector<8x784xf32>
    %cst_13 = arith.constant 5.000000e-01 : f32
    %18 = vector.broadcast %cst_13 : f32 to vector<8x784xf32>
    %19 = arith.addf %17, %18 : vector<8x784xf32>
    %c0_14 = arith.constant 0 : index
    %c0_15 = arith.constant 0 : index
    %20 = vector.load %arg6[%c0_14, %c0_15] : memref<8x784xf32, #tpu.memory_space<vmem>>, vector<8x784xf32>
    tpu.vector_store %arg6[%c0_14, %c0_15], %19 {strides = array<i32>} : memref<8x784xf32, #tpu.memory_space<vmem>>, vector<8x784xf32>,
    return
  }
  func.func @transform_0(%arg0: i32) -> (i32, i32) {
    %c0_i32 = arith.constant 0 : i32
    %c0_i32_0 = arith.constant 0 : i32
    return %arg0, %c0_i32 : i32, i32
  }
  func.func @transform_1(%arg0: i32) -> (i32, i32) {
    %c0_i32 = arith.constant 0 : i32
    %c0_i32_0 = arith.constant 0 : i32
    %c0_i32_1 = arith.constant 0 : i32
    return %c0_i32, %c0_i32_0 : i32, i32
  }
  func.func @transform_2(%arg0: i32) -> (i32, i32) {
    %c0_i32 = arith.constant 0 : i32
    %c0_i32_0 = arith.constant 0 : i32
    %c0_i32_1 = arith.constant 0 : i32
    return %c0_i32, %c0_i32_0 : i32, i32
  }
  func.func @transform_3(%arg0: i32) -> (i32, i32) {
    %c0_i32 = arith.constant 0 : i32
    %c0_i32_0 = arith.constant 0 : i32
    %c0_i32_1 = arith.constant 0 : i32
    return %c0_i32, %c0_i32_0 : i32, i32
  }
  func.func @transform_4(%arg0: i32) -> (i32, i32) {
    %c0_i32 = arith.constant 0 : i32
    %c0_i32_0 = arith.constant 0 : i32
    %c0_i32_1 = arith.constant 0 : i32
    return %c0_i32, %c0_i32_0 : i32, i32
  }
  func.func @transform_5(%arg0: i32) -> (i32, i32) {
    %c0_i32 = arith.constant 0 : i32
    %c0_i32_0 = arith.constant 0 : i32
    return %arg0, %c0_i32 : i32, i32
  }
}

</mosaic_0001>

<llo_original>
// kernel: tpu_custom_call.1
$region0: #{tpu_custom_call.1}
  #allocation0 [shape = 'u32[]', space=smem, size = 0x4, offset = 0x4, fixed_abs, tag = 'smem constant byte address 0x4 - core index']
  #allocation1 [shape = 'u32[144,128]{1,0:T(1,128)}', space=vmem, size = 0x12000, scoped, tag = 'internal scratch']
  %s0 = inlined_call_operand.vmem [shape: f32[8,784], index: 0, kind: input, shape index: {}]
  %s1 = inlined_call_operand.vmem [shape: f32[784,32], index: 1, kind: input, shape index: {}]
  %s2 = inlined_call_operand.vmem [shape: f32[1,32], index: 2, kind: input, shape index: {}]
  %s3 = inlined_call_operand.vmem [shape: f32[32,784], index: 3, kind: input, shape index: {}]
  %s4 = inlined_call_operand.vmem [shape: f32[1,784], index: 4, kind: input, shape index: {}]
  %s5 = inlined_call_operand.hbm [shape: f32[8,784], index: 5, kind: output, shape index: {}]
  %s6 = sld [smem:[#allocation0]]
  $region30: #{tpu_custom_call.1} parent=0
    _
  %s8 = ssub.s32 1, %s6
  %s9 = scalar_select 0, %s8, %s6
  $region1: #{tpu_custom_call.1} parent=0
    #allocation2 [shape = 'u8[28672]{0}', space=vmem, size = 0x7000, scoped, tag = 'output window, operand 0, single buffered']
    #allocation3 [shape = 's32[1]{0}', space=sflag, size = 0x4, scoped, tag = 'scoped memory for tpu_custom_call.1']
    %10 = vsyncpa [#allocation3], 0
    // Predicated region
    $region2: #{tpu_custom_call.1} parent=1 // pred_check
      _
    $region3: #{tpu_custom_call.1} parent=1 // pred_check_branch
      %12 = sbr.rel (0) target = $region5
    $region4: #{tpu_custom_call.1} parent=1 // pred_region
      _
    $region5: #{tpu_custom_call.1} parent=1 // pred_fallthru
      _
    // Predicated region
    $region6: #{tpu_custom_call.1} parent=1 // pred_check
      _
    $region7: #{tpu_custom_call.1} parent=1 // pred_check_branch
      %14 = sbr.rel (0) target = $region9
    $region8: #{tpu_custom_call.1} parent=1 // pred_region
      _
    $region9: #{tpu_custom_call.1} parent=1 // pred_fallthru
      _
    // Predicated region
    $region10: #{tpu_custom_call.1} parent=1 // pred_check
      _
    $region11: #{tpu_custom_call.1} parent=1 // pred_check_branch
      %16 = sbr.rel (0) target = $region13
    $region12: #{tpu_custom_call.1} parent=1 // pred_region
      _
    $region13: #{tpu_custom_call.1} parent=1 // pred_fallthru
      _
    // Predicated region
    $region14: #{tpu_custom_call.1} parent=1 // pred_check
      _
    $region15: #{tpu_custom_call.1} parent=1 // pred_check_branch
      %18 = sbr.rel (0) target = $region17
    $region16: #{tpu_custom_call.1} parent=1 // pred_region
      _
    $region17: #{tpu_custom_call.1} parent=1 // pred_fallthru
      _
    // Predicated region
    $region18: #{tpu_custom_call.1} parent=1 // pred_check
      _
    $region19: #{tpu_custom_call.1} parent=1 // pred_check_branch
      %20 = sbr.rel (0) target = $region21
    $region20: #{tpu_custom_call.1} parent=1 // pred_region
      _
    $region21: #{tpu_custom_call.1} parent=1 // pred_fallthru
      _
    %v21 = vld [vmem:[%s0] sm:$0xff]
    %v22 = vld [vmem:[%s0 + $0x8] sm:$0xff]
    %v23 = vld [vmem:[%s0 + $0x10] sm:$0xff]
    %v24 = vld [vmem:[%s0 + $0x18] sm:$0xff]
    %v25 = vld [vmem:[%s0 + $0x20] sm:$0xff]
    %v26 = vld [vmem:[%s0 + $0x28] sm:$0xff]
    %v27 = vld [vmem:[%s0 + $0x30] sm:$0xff]
    %v28 = vld [vmem:[%s1] sm:$0xff]
    %v29 = vld [vmem:[%s1 + $0x8] sm:$0xff]
    %v30 = vld [vmem:[%s1 + $0x10] sm:$0xff]
    %v31 = vld [vmem:[%s1 + $0x18] sm:$0xff]
    %v32 = vld [vmem:[%s1 + $0x20] sm:$0xff]
    %v33 = vld [vmem:[%s1 + $0x28] sm:$0xff]
    %v34 = vld [vmem:[%s1 + $0x30] sm:$0xff]
    %v35 = vld [vmem:[%s1 + $0x38] sm:$0xff]
    %v36 = vld [vmem:[%s1 + $0x40] sm:$0xff]
    %v37 = vld [vmem:[%s1 + $0x48] sm:$0xff]
    %v38 = vld [vmem:[%s1 + $0x50] sm:$0xff]
    %v39 = vld [vmem:[%s1 + $0x58] sm:$0xff]
    %v40 = vld [vmem:[%s1 + $0x60] sm:$0xff]
    %v41 = vld [vmem:[%s1 + $0x68] sm:$0xff]
    %v42 = vld [vmem:[%s1 + $0x70] sm:$0xff]
    %v43 = vld [vmem:[%s1 + $0x78] sm:$0xff]
    %v44 = vld [vmem:[%s1 + $0x80] sm:$0xff]
    %v45 = vld [vmem:[%s1 + $0x88] sm:$0xff]
    %v46 = vld [vmem:[%s1 + $0x90] sm:$0xff]
    %v47 = vld [vmem:[%s1 + $0x98] sm:$0xff]
    %v48 = vld [vmem:[%s1 + $0xa0] sm:$0xff]
    %v49 = vld [vmem:[%s1 + $0xa8] sm:$0xff]
    %v50 = vld [vmem:[%s1 + $0xb0] sm:$0xff]
    %v51 = vld [vmem:[%s1 + $0xb8] sm:$0xff]
    %v52 = vld [vmem:[%s1 + $0xc0] sm:$0xff]
    %v53 = vld [vmem:[%s1 + $0xc8] sm:$0xff]
    %v54 = vld [vmem:[%s1 + $0xd0] sm:$0xff]
    %v55 = vld [vmem:[%s1 + $0xd8] sm:$0xff]
    %v56 = vld [vmem:[%s1 + $0xe0] sm:$0xff]
    %v57 = vld [vmem:[%s1 + $0xe8] sm:$0xff]
    %v58 = vld [vmem:[%s1 + $0xf0] sm:$0xff]
    %v59 = vld [vmem:[%s1 + $0xf8] sm:$0xff]
    %v60 = vld [vmem:[%s1 + $0x100] sm:$0xff]
    %v61 = vld [vmem:[%s1 + $0x108] sm:$0xff]
    %v62 = vld [vmem:[%s1 + $0x110] sm:$0xff]
    %v63 = vld [vmem:[%s1 + $0x118] sm:$0xff]
    %v64 = vld [vmem:[%s1 + $0x120] sm:$0xff]
    %v65 = vld [vmem:[%s1 + $0x128] sm:$0xff]
    %v66 = vld [vmem:[%s1 + $0x130] sm:$0xff]
    %v67 = vld [vmem:[%s1 + $0x138] sm:$0xff]
    %v68 = vld [vmem:[%s1 + $0x140] sm:$0xff]
    %v69 = vld [vmem:[%s1 + $0x148] sm:$0xff]
    %v70 = vld [vmem:[%s1 + $0x150] sm:$0xff]
    %v71 = vld [vmem:[%s1 + $0x158] sm:$0xff]
    %v72 = vld [vmem:[%s1 + $0x160] sm:$0xff]
    %v73 = vld [vmem:[%s1 + $0x168] sm:$0xff]
    %v74 = vld [vmem:[%s1 + $0x170] sm:$0xff]
    %v75 = vld [vmem:[%s1 + $0x178] sm:$0xff]
    %v76 = vld [vmem:[%s1 + $0x180] sm:$0xff]
    %v77 = vld [vmem:[%s1 + $0x188] sm:$0xff]
    %v78 = vld [vmem:[%s1 + $0x190] sm:$0xff]
    %v79 = vld [vmem:[%s1 + $0x198] sm:$0xff]
    %v80 = vld [vmem:[%s1 + $0x1a0] sm:$0xff]
    %v81 = vld [vmem:[%s1 + $0x1a8] sm:$0xff]
    %v82 = vld [vmem:[%s1 + $0x1b0] sm:$0xff]
    %v83 = vld [vmem:[%s1 + $0x1b8] sm:$0xff]
    %v84 = vld [vmem:[%s1 + $0x1c0] sm:$0xff]
    %v85 = vld [vmem:[%s1 + $0x1c8] sm:$0xff]
    %v86 = vld [vmem:[%s1 + $0x1d0] sm:$0xff]
    %v87 = vld [vmem:[%s1 + $0x1d8] sm:$0xff]
    %v88 = vld [vmem:[%s1 + $0x1e0] sm:$0xff]
    %v89 = vld [vmem:[%s1 + $0x1e8] sm:$0xff]
    %v90 = vld [vmem:[%s1 + $0x1f0] sm:$0xff]
    %v91 = vld [vmem:[%s1 + $0x1f8] sm:$0xff]
    %v92 = vld [vmem:[%s1 + $0x200] sm:$0xff]
    %v93 = vld [vmem:[%s1 + $0x208] sm:$0xff]
    %v94 = vld [vmem:[%s1 + $0x210] sm:$0xff]
    %v95 = vld [vmem:[%s1 + $0x218] sm:$0xff]
    %v96 = vld [vmem:[%s1 + $0x220] sm:$0xff]
    %v97 = vld [vmem:[%s1 + $0x228] sm:$0xff]
    %v98 = vld [vmem:[%s1 + $0x230] sm:$0xff]
    %v99 = vld [vmem:[%s1 + $0x238] sm:$0xff]
    %v100 = vld [vmem:[%s1 + $0x240] sm:$0xff]
    %v101 = vld [vmem:[%s1 + $0x248] sm:$0xff]
    %v102 = vld [vmem:[%s1 + $0x250] sm:$0xff]
    %v103 = vld [vmem:[%s1 + $0x258] sm:$0xff]
    %v104 = vld [vmem:[%s1 + $0x260] sm:$0xff]
    %v105 = vld [vmem:[%s1 + $0x268] sm:$0xff]
    %v106 = vld [vmem:[%s1 + $0x270] sm:$0xff]
    %v107 = vld [vmem:[%s1 + $0x278] sm:$0xff]
    %v108 = vld [vmem:[%s1 + $0x280] sm:$0xff]
    %v109 = vld [vmem:[%s1 + $0x288] sm:$0xff]
    %v110 = vld [vmem:[%s1 + $0x290] sm:$0xff]
    %v111 = vld [vmem:[%s1 + $0x298] sm:$0xff]
    %v112 = vld [vmem:[%s1 + $0x2a0] sm:$0xff]
    %v113 = vld [vmem:[%s1 + $0x2a8] sm:$0xff]
    %v114 = vld [vmem:[%s1 + $0x2b0] sm:$0xff]
    %v115 = vld [vmem:[%s1 + $0x2b8] sm:$0xff]
    %v116 = vld [vmem:[%s1 + $0x2c0] sm:$0xff]
    %v117 = vld [vmem:[%s1 + $0x2c8] sm:$0xff]
    %v118 = vld [vmem:[%s1 + $0x2d0] sm:$0xff]
    %v119 = vld [vmem:[%s1 + $0x2d8] sm:$0xff]
    %v120 = vld [vmem:[%s1 + $0x2e0] sm:$0xff]
    %v121 = vld [vmem:[%s1 + $0x2e8] sm:$0xff]
    %v122 = vld [vmem:[%s1 + $0x2f0] sm:$0xff]
    %v123 = vld [vmem:[%s1 + $0x2f8] sm:$0xff]
    %v124 = vld [vmem:[%s1 + $0x300] sm:$0xff]
    %v125 = vld [vmem:[%s1 + $0x308] sm:$0xff]
    %v126 = vld [vmem:[%s2] sm:$0x1]
    %v128 = vlaneseq
    %v129 = vshrl.u32 %v128, 7
    %v130 = vsub.s32 0, %v129
    %v131 = vrot.slane %v126, %v130
    %vm133 = vcmask 130048
    %v135 = vsel %vm133, %v27, 0
    %137 = vmatprep.subr.mxu0 0.0
    %138 = vmatpush1.msra.mxu0 %v43
    %139 = vmatprep.subr.mxu0 0.0
    %140 = vmatpush1.msra.mxu0 %v42
    %141 = vmatprep.subr.mxu0 0.0
    %142 = vmatpush1.msra.mxu0 %v41
    %143 = vmatprep.subr.mxu0 0.0
    %144 = vmatpush1.msra.mxu0 %v40
    %145 = vmatprep.subr.mxu0 0.0
    %146 = vmatpush1.msra.mxu0 %v39
    %147 = vmatprep.subr.mxu0 0.0
    %148 = vmatpush1.msra.mxu0 %v38
    %149 = vmatprep.subr.mxu0 0.0
    %150 = vmatpush1.msra.mxu0 %v37
    %151 = vmatprep.subr.mxu0 0.0
    %152 = vmatpush1.msra.mxu0 %v36
    %153 = vmatprep.subr.mxu0 0.0
    %154 = vmatpush1.msra.mxu0 %v35
    %155 = vmatprep.subr.mxu0 0.0
    %156 = vmatpush1.msra.mxu0 %v34
    %157 = vmatprep.subr.mxu0 0.0
    %158 = vmatpush1.msra.mxu0 %v33
    %159 = vmatprep.subr.mxu0 0.0
    %160 = vmatpush1.msra.mxu0 %v32
    %161 = vmatprep.subr.mxu0 0.0
    %162 = vmatpush1.msra.mxu0 %v31
    %163 = vmatprep.subr.mxu0 0.0
    %164 = vmatpush1.msra.mxu0 %v30
    %165 = vmatprep.subr.mxu0 0.0
    %166 = vmatpush1.msra.mxu0 %v29
    %167 = vmatprep.subr.mxu0 0.0
    %168 = vmatpush1.msra.mxu0 %v28
    %169 = vmatprep.subr.mxu0 0.0
    %170 = vmatpush2.msra.mxu0 %v59
    %171 = vmatprep.subr.mxu0 0.0
    %172 = vmatpush2.msra.mxu0 %v58
    %173 = vmatprep.subr.mxu0 0.0
    %174 = vmatpush2.msra.mxu0 %v57
    %175 = vmatprep.subr.mxu0 0.0
    %176 = vmatpush2.msra.mxu0 %v56
    %177 = vmatprep.subr.mxu0 0.0
    %178 = vmatpush2.msra.mxu0 %v55
    %179 = vmatprep.subr.mxu0 0.0
    %180 = vmatpush2.msra.mxu0 %v54
    %181 = vmatprep.subr.mxu0 0.0
    %182 = vmatpush2.msra.mxu0 %v53
    %183 = vmatprep.subr.mxu0 0.0
    %184 = vmatpush2.msra.mxu0 %v52
    %185 = vmatprep.subr.mxu0 0.0
    %186 = vmatpush2.msra.mxu0 %v51
    %187 = vmatprep.subr.mxu0 0.0
    %188 = vmatpush2.msra.mxu0 %v50
    %189 = vmatprep.subr.mxu0 0.0
    %190 = vmatpush2.msra.mxu0 %v49
    %191 = vmatprep.subr.mxu0 0.0
    %192 = vmatpush2.msra.mxu0 %v48
    %193 = vmatprep.subr.mxu0 0.0
    %194 = vmatpush2.msra.mxu0 %v47
    %195 = vmatprep.subr.mxu0 0.0
    %196 = vmatpush2.msra.mxu0 %v46
    %197 = vmatprep.subr.mxu0 0.0
    %198 = vmatpush2.msra.mxu0 %v45
    %199 = vmatprep.subr.mxu0 0.0
    %200 = vmatpush2.msra.mxu0 %v44
    %201 = vmatprep.mubr.f32.mxu0 %v22
    %202 = vmatmul.mubr.f32.gmra.mxu0 %v21
    %v203 = vpop.f32.mrf.mxu0
    %v204 = vadd.f32 %v131, %v203
    %v205 = vpop.f32.mrf.mxu0
    %206 = vdwg.mxu0
    %207 = vmatprep.subr.mxu0 0.0
    %208 = vmatpush1.msra.mxu0 %v75
    %209 = vmatprep.subr.mxu0 0.0
    %210 = vmatpush1.msra.mxu0 %v74
    %211 = vmatprep.subr.mxu0 0.0
    %212 = vmatpush1.msra.mxu0 %v73
    %213 = vmatprep.subr.mxu0 0.0
    %214 = vmatpush1.msra.mxu0 %v72
    %215 = vmatprep.subr.mxu0 0.0
    %216 = vmatpush1.msra.mxu0 %v71
    %217 = vmatprep.subr.mxu0 0.0
    %218 = vmatpush1.msra.mxu0 %v70
    %219 = vmatprep.subr.mxu0 0.0
    %220 = vmatpush1.msra.mxu0 %v69
    %221 = vmatprep.subr.mxu0 0.0
    %222 = vmatpush1.msra.mxu0 %v68
    %223 = vmatprep.subr.mxu0 0.0
    %224 = vmatpush1.msra.mxu0 %v67
    %225 = vmatprep.subr.mxu0 0.0
    %226 = vmatpush1.msra.mxu0 %v66
    %227 = vmatprep.subr.mxu0 0.0
    %228 = vmatpush1.msra.mxu0 %v65
    %229 = vmatprep.subr.mxu0 0.0
    %230 = vmatpush1.msra.mxu0 %v64
    %231 = vmatprep.subr.mxu0 0.0
    %232 = vmatpush1.msra.mxu0 %v63
    %233 = vmatprep.subr.mxu0 0.0
    %234 = vmatpush1.msra.mxu0 %v62
    %235 = vmatprep.subr.mxu0 0.0
    %236 = vmatpush1.msra.mxu0 %v61
    %237 = vmatprep.subr.mxu0 0.0
    %238 = vmatpush1.msra.mxu0 %v60
    %239 = vmatprep.subr.mxu0 0.0
    %240 = vmatpush2.msra.mxu0 %v91
    %241 = vmatprep.subr.mxu0 0.0
    %242 = vmatpush2.msra.mxu0 %v90
    %243 = vmatprep.subr.mxu0 0.0
    %244 = vmatpush2.msra.mxu0 %v89
    %245 = vmatprep.subr.mxu0 0.0
    %246 = vmatpush2.msra.mxu0 %v88
    %247 = vmatprep.subr.mxu0 0.0
    %248 = vmatpush2.msra.mxu0 %v87
    %249 = vmatprep.subr.mxu0 0.0
    %250 = vmatpush2.msra.mxu0 %v86
    %251 = vmatprep.subr.mxu0 0.0
    %252 = vmatpush2.msra.mxu0 %v85
    %253 = vmatprep.subr.mxu0 0.0
    %254 = vmatpush2.msra.mxu0 %v84
    %255 = vmatprep.subr.mxu0 0.0
    %256 = vmatpush2.msra.mxu0 %v83
    %257 = vmatprep.subr.mxu0 0.0
    %258 = vmatpush2.msra.mxu0 %v82
    %259 = vmatprep.subr.mxu0 0.0
    %260 = vmatpush2.msra.mxu0 %v81
    %261 = vmatprep.subr.mxu0 0.0
    %262 = vmatpush2.msra.mxu0 %v80
    %263 = vmatprep.subr.mxu0 0.0
    %264 = vmatpush2.msra.mxu0 %v79
    %265 = vmatprep.subr.mxu0 0.0
    %266 = vmatpush2.msra.mxu0 %v78
    %267 = vmatprep.subr.mxu0 0.0
    %268 = vmatpush2.msra.mxu0 %v77
    %269 = vmatprep.subr.mxu0 0.0
    %270 = vmatpush2.msra.mxu0 %v76
    %271 = vmatprep.mubr.f32.mxu0 %v24
    %272 = vmatmul.mubr.f32.gmra.mxu0 %v23
    %v273 = vpop.f32.mrf.mxu0
    %v274 = vadd.f32 %v204, %v273
    %v275 = vpop.f32.mrf.mxu0
    %276 = vdwg.mxu0
    %277 = vmatprep.subr.mxu0 0.0
    %278 = vmatpush1.msra.mxu0 %v107
    %279 = vmatprep.subr.mxu0 0.0
    %280 = vmatpush1.msra.mxu0 %v106
    %281 = vmatprep.subr.mxu0 0.0
    %282 = vmatpush1.msra.mxu0 %v105
    %283 = vmatprep.subr.mxu0 0.0
    %284 = vmatpush1.msra.mxu0 %v104
    %285 = vmatprep.subr.mxu0 0.0
    %286 = vmatpush1.msra.mxu0 %v103
    %287 = vmatprep.subr.mxu0 0.0
    %288 = vmatpush1.msra.mxu0 %v102
    %289 = vmatprep.subr.mxu0 0.0
    %290 = vmatpush1.msra.mxu0 %v101
    %291 = vmatprep.subr.mxu0 0.0
    %292 = vmatpush1.msra.mxu0 %v100
    %293 = vmatprep.subr.mxu0 0.0
    %294 = vmatpush1.msra.mxu0 %v99
    %295 = vmatprep.subr.mxu0 0.0
    %296 = vmatpush1.msra.mxu0 %v98
    %297 = vmatprep.subr.mxu0 0.0
    %298 = vmatpush1.msra.mxu0 %v97
    %299 = vmatprep.subr.mxu0 0.0
    %300 = vmatpush1.msra.mxu0 %v96
    %301 = vmatprep.subr.mxu0 0.0
    %302 = vmatpush1.msra.mxu0 %v95
    %303 = vmatprep.subr.mxu0 0.0
    %304 = vmatpush1.msra.mxu0 %v94
    %305 = vmatprep.subr.mxu0 0.0
    %306 = vmatpush1.msra.mxu0 %v93
    %307 = vmatprep.subr.mxu0 0.0
    %308 = vmatpush1.msra.mxu0 %v92
    %309 = vmatprep.subr.mxu0 0.0
    %310 = vmatpush2.msra.mxu0 %v123
    %311 = vmatprep.subr.mxu0 0.0
    %312 = vmatpush2.msra.mxu0 %v122
    %313 = vmatprep.subr.mxu0 0.0
    %314 = vmatpush2.msra.mxu0 %v121
    %315 = vmatprep.subr.mxu0 0.0
    %316 = vmatpush2.msra.mxu0 %v120
    %317 = vmatprep.subr.mxu0 0.0
    %318 = vmatpush2.msra.mxu0 %v119
    %319 = vmatprep.subr.mxu0 0.0
    %320 = vmatpush2.msra.mxu0 %v118
    %321 = vmatprep.subr.mxu0 0.0
    %322 = vmatpush2.msra.mxu0 %v117
    %323 = vmatprep.subr.mxu0 0.0
    %324 = vmatpush2.msra.mxu0 %v116
    %325 = vmatprep.subr.mxu0 0.0
    %326 = vmatpush2.msra.mxu0 %v115
    %327 = vmatprep.subr.mxu0 0.0
    %328 = vmatpush2.msra.mxu0 %v114
    %329 = vmatprep.subr.mxu0 0.0
    %330 = vmatpush2.msra.mxu0 %v113
    %331 = vmatprep.subr.mxu0 0.0
    %332 = vmatpush2.msra.mxu0 %v112
    %333 = vmatprep.subr.mxu0 0.0
    %334 = vmatpush2.msra.mxu0 %v111
    %335 = vmatprep.subr.mxu0 0.0
    %336 = vmatpush2.msra.mxu0 %v110
    %337 = vmatprep.subr.mxu0 0.0
    %338 = vmatpush2.msra.mxu0 %v109
    %339 = vmatprep.subr.mxu0 0.0
    %340 = vmatpush2.msra.mxu0 %v108
    %341 = vmatprep.mubr.f32.mxu0 %v26
    %342 = vmatmul.mubr.f32.gmra.mxu0 %v25
    %v343 = vpop.f32.mrf.mxu0
    %v344 = vadd.f32 %v274, %v343
    %v345 = vpop.f32.mrf.mxu0
    %346 = vdwg.mxu0
    %347 = vmatprep.subr.mxu0 0.0
    %348 = vmatpush1.msra.mxu0 0.0
    %349 = vmatprep.subr.mxu0 0.0
    %350 = vmatpush1.msra.mxu0 0.0
    %351 = vmatprep.subr.mxu0 0.0
    %352 = vmatpush1.msra.mxu0 0.0
    %353 = vmatprep.subr.mxu0 0.0
    %354 = vmatpush1.msra.mxu0 0.0
    %355 = vmatprep.subr.mxu0 0.0
    %356 = vmatpush1.msra.mxu0 0.0
    %357 = vmatprep.subr.mxu0 0.0
    %358 = vmatpush1.msra.mxu0 0.0
    %359 = vmatprep.subr.mxu0 0.0
    %360 = vmatpush1.msra.mxu0 0.0
    %361 = vmatprep.subr.mxu0 0.0
    %362 = vmatpush1.msra.mxu0 0.0
    %363 = vmatprep.subr.mxu0 0.0
    %364 = vmatpush1.msra.mxu0 0.0
    %365 = vmatprep.subr.mxu0 0.0
    %366 = vmatpush1.msra.mxu0 0.0
    %367 = vmatprep.subr.mxu0 0.0
    %368 = vmatpush1.msra.mxu0 0.0
    %369 = vmatprep.subr.mxu0 0.0
    %370 = vmatpush1.msra.mxu0 0.0
    %371 = vmatprep.subr.mxu0 0.0
    %372 = vmatpush1.msra.mxu0 0.0
    %373 = vmatprep.subr.mxu0 0.0
    %374 = vmatpush1.msra.mxu0 0.0
    %375 = vmatprep.subr.mxu0 0.0
    %376 = vmatpush1.msra.mxu0 %v125
    %377 = vmatprep.subr.mxu0 0.0
    %378 = vmatpush1.msra.mxu0 %v124
    %379 = vmatprep.subr.mxu0 0.0
    %380 = vmatpush2.msra.mxu0 0.0
    %381 = vmatprep.subr.mxu0 0.0
    %382 = vmatpush2.msra.mxu0 0.0
    %383 = vmatprep.subr.mxu0 0.0
    %384 = vmatpush2.msra.mxu0 0.0
    %385 = vmatprep.subr.mxu0 0.0
    %386 = vmatpush2.msra.mxu0 0.0
    %387 = vmatprep.subr.mxu0 0.0
    %388 = vmatpush2.msra.mxu0 0.0
    %389 = vmatprep.subr.mxu0 0.0
    %390 = vmatpush2.msra.mxu0 0.0
    %391 = vmatprep.subr.mxu0 0.0
    %392 = vmatpush2.msra.mxu0 0.0
    %393 = vmatprep.subr.mxu0 0.0
    %394 = vmatpush2.msra.mxu0 0.0
    %395 = vmatprep.subr.mxu0 0.0
    %396 = vmatpush2.msra.mxu0 0.0
    %397 = vmatprep.subr.mxu0 0.0
    %398 = vmatpush2.msra.mxu0 0.0
    %399 = vmatprep.subr.mxu0 0.0
    %400 = vmatpush2.msra.mxu0 0.0
    %401 = vmatprep.subr.mxu0 0.0
    %402 = vmatpush2.msra.mxu0 0.0
    %403 = vmatprep.subr.mxu0 0.0
    %404 = vmatpush2.msra.mxu0 0.0
    %405 = vmatprep.subr.mxu0 0.0
    %406 = vmatpush2.msra.mxu0 0.0
    %407 = vmatprep.subr.mxu0 0.0
    %408 = vmatpush2.msra.mxu0 0.0
    %409 = vmatprep.subr.mxu0 0.0
    %410 = vmatpush2.msra.mxu0 0.0
    %411 = vmatprep.mubr.f32.mxu0 0.0
    %412 = vmatmul.mubr.f32.gmra.mxu0 %v135
    %v413 = vpop.f32.mrf.mxu0
    %v414 = vadd.f32 %v344, %v413
    %v415 = vpop.f32.mrf.mxu0
    %416 = vdwg.mxu0
    %v417 = vmax.f32 %v414, 0.0
    %v418 = vld [vmem:[%s3] sm:$0xff]
    %v419 = vld [vmem:[%s3 + $0x8] sm:$0xff]
    %v420 = vld [vmem:[%s3 + $0x10] sm:$0xff]
    %v421 = vld [vmem:[%s3 + $0x18] sm:$0xff]
    %v422 = vld [vmem:[%s3 + $0x20] sm:$0xff]
    %v423 = vld [vmem:[%s3 + $0x28] sm:$0xff]
    %v424 = vld [vmem:[%s3 + $0x30] sm:$0xff]
    %v425 = vld [vmem:[%s3 + $0x38] sm:$0xff]
    %v426 = vld [vmem:[%s3 + $0x40] sm:$0xff]
    %v427 = vld [vmem:[%s3 + $0x48] sm:$0xff]
    %v428 = vld [vmem:[%s3 + $0x50] sm:$0xff]
    %v429 = vld [vmem:[%s3 + $0x58] sm:$0xff]
    %v430 = vld [vmem:[%s3 + $0x60] sm:$0xff]
    %v431 = vld [vmem:[%s3 + $0x68] sm:$0xff]
    %v432 = vld [vmem:[%s3 + $0x70] sm:$0xff]
    %v433 = vld [vmem:[%s3 + $0x78] sm:$0xff]
    %v434 = vld [vmem:[%s3 + $0x80] sm:$0xff]
    %v435 = vld [vmem:[%s3 + $0x88] sm:$0xff]
    %v436 = vld [vmem:[%s3 + $0x90] sm:$0xff]
    %v437 = vld [vmem:[%s3 + $0x98] sm:$0xff]
    %v438 = vld [vmem:[%s3 + $0xa0] sm:$0xff]
    %v439 = vld [vmem:[%s3 + $0xa8] sm:$0xff]
    %v440 = vld [vmem:[%s3 + $0xb0] sm:$0xff]
    %v441 = vld [vmem:[%s3 + $0xb8] sm:$0xff]
    %v442 = vld [vmem:[%s3 + $0xc0] sm:$0xff]
    %v443 = vld [vmem:[%s3 + $0xc8] sm:$0xff]
    %v444 = vld [vmem:[%s3 + $0xd0] sm:$0xff]
    %v445 = vld [vmem:[%s3 + $0xd8] sm:$0xff]
    %v446 = vld [vmem:[%s4] sm:$0x7f]
    %v448 = vlaneseq
    %v449 = vshrl.u32 %v448, 7
    %v450 = vsub.s32 0, %v449
    %v451 = vrot.slane %v446, %v450
    %v452 = vlaneseq
    %v453 = vshrl.u32 %v452, 7
    %v454 = vsub.s32 1, %v453
    %v455 = vrot.slane %v446, %v454
    %v456 = vlaneseq
    %v457 = vshrl.u32 %v456, 7
    %v458 = vsub.s32 2, %v457
    %v459 = vrot.slane %v446, %v458
    %v460 = vlaneseq
    %v461 = vshrl.u32 %v460, 7
    %v462 = vsub.s32 3, %v461
    %v463 = vrot.slane %v446, %v462
    %v464 = vlaneseq
    %v465 = vshrl.u32 %v464, 7
    %v466 = vsub.s32 4, %v465
    %v467 = vrot.slane %v446, %v466
    %v468 = vlaneseq
    %v469 = vshrl.u32 %v468, 7
    %v470 = vsub.s32 5, %v469
    %v471 = vrot.slane %v446, %v470
    %v472 = vlaneseq
    %v473 = vshrl.u32 %v472, 7
    %v474 = vsub.s32 6, %v473
    %v475 = vrot.slane %v446, %v474
    %vm483 = vcmask 261120
    %v485 = vsel %vm483, %v417, 0
    %487 = vmatprep.subr.mxu0 0.0
    %488 = vmatpush1.msra.mxu0 0.0
    %489 = vmatprep.subr.mxu0 0.0
    %490 = vmatpush1.msra.mxu0 0.0
    %491 = vmatprep.subr.mxu0 0.0
    %492 = vmatpush1.msra.mxu0 0.0
    %493 = vmatprep.subr.mxu0 0.0
    %494 = vmatpush1.msra.mxu0 0.0
    %495 = vmatprep.subr.mxu0 0.0
    %496 = vmatpush1.msra.mxu0 0.0
    %497 = vmatprep.subr.mxu0 0.0
    %498 = vmatpush1.msra.mxu0 0.0
    %499 = vmatprep.subr.mxu0 0.0
    %500 = vmatpush1.msra.mxu0 0.0
    %501 = vmatprep.subr.mxu0 0.0
    %502 = vmatpush1.msra.mxu0 0.0
    %503 = vmatprep.subr.mxu0 0.0
    %504 = vmatpush1.msra.mxu0 0.0
    %505 = vmatprep.subr.mxu0 0.0
    %506 = vmatpush1.msra.mxu0 0.0
    %507 = vmatprep.subr.mxu0 0.0
    %508 = vmatpush1.msra.mxu0 0.0
    %509 = vmatprep.subr.mxu0 0.0
    %510 = vmatpush1.msra.mxu0 0.0
    %511 = vmatprep.subr.mxu0 %v440
    %512 = vmatpush1.msra.mxu0 %v439
    %513 = vmatprep.subr.mxu0 %v433
    %514 = vmatpush1.msra.mxu0 %v432
    %515 = vmatprep.subr.mxu0 %v426
    %516 = vmatpush1.msra.mxu0 %v425
    %517 = vmatprep.subr.mxu0 %v419
    %518 = vmatpush1.msra.mxu0 %v418
    %519 = vmatprep.subr.mxu0 0.0
    %520 = vmatpush2.msra.mxu0 0.0
    %521 = vmatprep.subr.mxu0 0.0
    %522 = vmatpush2.msra.mxu0 0.0
    %523 = vmatprep.subr.mxu0 0.0
    %524 = vmatpush2.msra.mxu0 0.0
    %525 = vmatprep.subr.mxu0 0.0
    %526 = vmatpush2.msra.mxu0 0.0
    %527 = vmatprep.subr.mxu0 0.0
    %528 = vmatpush2.msra.mxu0 0.0
    %529 = vmatprep.subr.mxu0 0.0
    %530 = vmatpush2.msra.mxu0 0.0
    %531 = vmatprep.subr.mxu0 0.0
    %532 = vmatpush2.msra.mxu0 0.0
    %533 = vmatprep.subr.mxu0 0.0
    %534 = vmatpush2.msra.mxu0 0.0
    %535 = vmatprep.subr.mxu0 0.0
    %536 = vmatpush2.msra.mxu0 0.0
    %537 = vmatprep.subr.mxu0 0.0
    %538 = vmatpush2.msra.mxu0 0.0
    %539 = vmatprep.subr.mxu0 0.0
    %540 = vmatpush2.msra.mxu0 0.0
    %541 = vmatprep.subr.mxu0 0.0
    %542 = vmatpush2.msra.mxu0 0.0
    %543 = vmatprep.subr.mxu0 0.0
    %544 = vmatpush2.msra.mxu0 0.0
    %545 = vmatprep.subr.mxu0 0.0
    %546 = vmatpush2.msra.mxu0 0.0
    %547 = vmatprep.subr.mxu0 0.0
    %548 = vmatpush2.msra.mxu0 0.0
    %549 = vmatprep.subr.mxu0 0.0
    %550 = vmatpush2.msra.mxu0 0.0
    %551 = vmatprep.mubr.f32.mxu0 0.0
    %552 = vmatmul.mubr.f32.gmra.mxu0 %v485
    %v553 = vpop.f32.mrf.mxu0
    %v554 = vadd.f32 %v451, %v553
    %v555 = vpop.f32.mrf.mxu0
    %v556 = vadd.f32 %v455, %v555
    %557 = vdwg.mxu0
    %558 = vmatprep.subr.mxu0 0.0
    %559 = vmatpush1.msra.mxu0 0.0
    %560 = vmatprep.subr.mxu0 0.0
    %561 = vmatpush1.msra.mxu0 0.0
    %562 = vmatprep.subr.mxu0 0.0
    %563 = vmatpush1.msra.mxu0 0.0
    %564 = vmatprep.subr.mxu0 0.0
    %565 = vmatpush1.msra.mxu0 0.0
    %566 = vmatprep.subr.mxu0 0.0
    %567 = vmatpush1.msra.mxu0 0.0
    %568 = vmatprep.subr.mxu0 0.0
    %569 = vmatpush1.msra.mxu0 0.0
    %570 = vmatprep.subr.mxu0 0.0
    %571 = vmatpush1.msra.mxu0 0.0
    %572 = vmatprep.subr.mxu0 0.0
    %573 = vmatpush1.msra.mxu0 0.0
    %574 = vmatprep.subr.mxu0 0.0
    %575 = vmatpush1.msra.mxu0 0.0
    %576 = vmatprep.subr.mxu0 0.0
    %577 = vmatpush1.msra.mxu0 0.0
    %578 = vmatprep.subr.mxu0 0.0
    %579 = vmatpush1.msra.mxu0 0.0
    %580 = vmatprep.subr.mxu0 0.0
    %581 = vmatpush1.msra.mxu0 0.0
    %582 = vmatprep.subr.mxu0 %v442
    %583 = vmatpush1.msra.mxu0 %v441
    %584 = vmatprep.subr.mxu0 %v435
    %585 = vmatpush1.msra.mxu0 %v434
    %586 = vmatprep.subr.mxu0 %v428
    %587 = vmatpush1.msra.mxu0 %v427
    %588 = vmatprep.subr.mxu0 %v421
    %589 = vmatpush1.msra.mxu0 %v420
    %590 = vmatprep.subr.mxu0 0.0
    %591 = vmatpush2.msra.mxu0 0.0
    %592 = vmatprep.subr.mxu0 0.0
    %593 = vmatpush2.msra.mxu0 0.0
    %594 = vmatprep.subr.mxu0 0.0
    %595 = vmatpush2.msra.mxu0 0.0
    %596 = vmatprep.subr.mxu0 0.0
    %597 = vmatpush2.msra.mxu0 0.0
    %598 = vmatprep.subr.mxu0 0.0
    %599 = vmatpush2.msra.mxu0 0.0
    %600 = vmatprep.subr.mxu0 0.0
    %601 = vmatpush2.msra.mxu0 0.0
    %602 = vmatprep.subr.mxu0 0.0
    %603 = vmatpush2.msra.mxu0 0.0
    %604 = vmatprep.subr.mxu0 0.0
    %605 = vmatpush2.msra.mxu0 0.0
    %606 = vmatprep.subr.mxu0 0.0
    %607 = vmatpush2.msra.mxu0 0.0
    %608 = vmatprep.subr.mxu0 0.0
    %609 = vmatpush2.msra.mxu0 0.0
    %610 = vmatprep.subr.mxu0 0.0
    %611 = vmatpush2.msra.mxu0 0.0
    %612 = vmatprep.subr.mxu0 0.0
    %613 = vmatpush2.msra.mxu0 0.0
    %614 = vmatprep.subr.mxu0 0.0
    %615 = vmatpush2.msra.mxu0 0.0
    %616 = vmatprep.subr.mxu0 0.0
    %617 = vmatpush2.msra.mxu0 0.0
    %618 = vmatprep.subr.mxu0 0.0
    %619 = vmatpush2.msra.mxu0 0.0
    %620 = vmatprep.subr.mxu0 0.0
    %621 = vmatpush2.msra.mxu0 0.0
    %622 = vmatprep.mubr.f32.mxu0 0.0
    %623 = vmatmul.mubr.f32.gmra.mxu0 %v485
    %v624 = vpop.f32.mrf.mxu0
    %v625 = vadd.f32 %v459, %v624
    %v626 = vpop.f32.mrf.mxu0
    %v627 = vadd.f32 %v463, %v626
    %628 = vdwg.mxu0
    %629 = vmatprep.subr.mxu0 0.0
    %630 = vmatpush1.msra.mxu0 0.0
    %631 = vmatprep.subr.mxu0 0.0
    %632 = vmatpush1.msra.mxu0 0.0
    %633 = vmatprep.subr.mxu0 0.0
    %634 = vmatpush1.msra.mxu0 0.0
    %635 = vmatprep.subr.mxu0 0.0
    %636 = vmatpush1.msra.mxu0 0.0
    %637 = vmatprep.subr.mxu0 0.0
    %638 = vmatpush1.msra.mxu0 0.0
    %639 = vmatprep.subr.mxu0 0.0
    %640 = vmatpush1.msra.mxu0 0.0
    %641 = vmatprep.subr.mxu0 0.0
    %642 = vmatpush1.msra.mxu0 0.0
    %643 = vmatprep.subr.mxu0 0.0
    %644 = vmatpush1.msra.mxu0 0.0
    %645 = vmatprep.subr.mxu0 0.0
    %646 = vmatpush1.msra.mxu0 0.0
    %647 = vmatprep.subr.mxu0 0.0
    %648 = vmatpush1.msra.mxu0 0.0
    %649 = vmatprep.subr.mxu0 0.0
    %650 = vmatpush1.msra.mxu0 0.0
    %651 = vmatprep.subr.mxu0 0.0
    %652 = vmatpush1.msra.mxu0 0.0
    %653 = vmatprep.subr.mxu0 %v444
    %654 = vmatpush1.msra.mxu0 %v443
    %655 = vmatprep.subr.mxu0 %v437
    %656 = vmatpush1.msra.mxu0 %v436
    %657 = vmatprep.subr.mxu0 %v430
    %658 = vmatpush1.msra.mxu0 %v429
    %659 = vmatprep.subr.mxu0 %v423
    %660 = vmatpush1.msra.mxu0 %v422
    %661 = vmatprep.subr.mxu0 0.0
    %662 = vmatpush2.msra.mxu0 0.0
    %663 = vmatprep.subr.mxu0 0.0
    %664 = vmatpush2.msra.mxu0 0.0
    %665 = vmatprep.subr.mxu0 0.0
    %666 = vmatpush2.msra.mxu0 0.0
    %667 = vmatprep.subr.mxu0 0.0
    %668 = vmatpush2.msra.mxu0 0.0
    %669 = vmatprep.subr.mxu0 0.0
    %670 = vmatpush2.msra.mxu0 0.0
    %671 = vmatprep.subr.mxu0 0.0
    %672 = vmatpush2.msra.mxu0 0.0
    %673 = vmatprep.subr.mxu0 0.0
    %674 = vmatpush2.msra.mxu0 0.0
    %675 = vmatprep.subr.mxu0 0.0
    %676 = vmatpush2.msra.mxu0 0.0
    %677 = vmatprep.subr.mxu0 0.0
    %678 = vmatpush2.msra.mxu0 0.0
    %679 = vmatprep.subr.mxu0 0.0
    %680 = vmatpush2.msra.mxu0 0.0
    %681 = vmatprep.subr.mxu0 0.0
    %682 = vmatpush2.msra.mxu0 0.0
    %683 = vmatprep.subr.mxu0 0.0
    %684 = vmatpush2.msra.mxu0 0.0
    %685 = vmatprep.subr.mxu0 0.0
    %686 = vmatpush2.msra.mxu0 0.0
    %687 = vmatprep.subr.mxu0 0.0
    %688 = vmatpush2.msra.mxu0 0.0
    %689 = vmatprep.subr.mxu0 0.0
    %690 = vmatpush2.msra.mxu0 0.0
    %691 = vmatprep.subr.mxu0 0.0
    %692 = vmatpush2.msra.mxu0 0.0
    %693 = vmatprep.mubr.f32.mxu0 0.0
    %694 = vmatmul.mubr.f32.gmra.mxu0 %v485
    %v695 = vpop.f32.mrf.mxu0
    %v696 = vadd.f32 %v467, %v695
    %v697 = vpop.f32.mrf.mxu0
    %v698 = vadd.f32 %v471, %v697
    %699 = vdwg.mxu0
    %700 = vmatprep.subr.mxu0 0.0
    %701 = vmatpush1.msra.mxu0 0.0
    %702 = vmatprep.subr.mxu0 0.0
    %703 = vmatpush1.msra.mxu0 0.0
    %704 = vmatprep.subr.mxu0 0.0
    %705 = vmatpush1.msra.mxu0 0.0
    %706 = vmatprep.subr.mxu0 0.0
    %707 = vmatpush1.msra.mxu0 0.0
    %708 = vmatprep.subr.mxu0 0.0
    %709 = vmatpush1.msra.mxu0 0.0
    %710 = vmatprep.subr.mxu0 0.0
    %711 = vmatpush1.msra.mxu0 0.0
    %712 = vmatprep.subr.mxu0 0.0
    %713 = vmatpush1.msra.mxu0 0.0
    %714 = vmatprep.subr.mxu0 0.0
    %715 = vmatpush1.msra.mxu0 0.0
    %716 = vmatprep.subr.mxu0 0.0
    %717 = vmatpush1.msra.mxu0 0.0
    %718 = vmatprep.subr.mxu0 0.0
    %719 = vmatpush1.msra.mxu0 0.0
    %720 = vmatprep.subr.mxu0 0.0
    %721 = vmatpush1.msra.mxu0 0.0
    %722 = vmatprep.subr.mxu0 0.0
    %723 = vmatpush1.msra.mxu0 0.0
    %724 = vmatprep.subr.mxu0 0.0
    %725 = vmatpush1.msra.mxu0 %v445
    %726 = vmatprep.subr.mxu0 0.0
    %727 = vmatpush1.msra.mxu0 %v438
    %728 = vmatprep.subr.mxu0 0.0
    %729 = vmatpush1.msra.mxu0 %v431
    %730 = vmatprep.subr.mxu0 0.0
    %731 = vmatpush1.msra.mxu0 %v424
    %732 = vmatprep.subr.mxu0 0.0
    %733 = vmatpush2.msra.mxu0 0.0
    %734 = vmatprep.subr.mxu0 0.0
    %735 = vmatpush2.msra.mxu0 0.0
    %736 = vmatprep.subr.mxu0 0.0
    %737 = vmatpush2.msra.mxu0 0.0
    %738 = vmatprep.subr.mxu0 0.0
    %739 = vmatpush2.msra.mxu0 0.0
    %740 = vmatprep.subr.mxu0 0.0
    %741 = vmatpush2.msra.mxu0 0.0
    %742 = vmatprep.subr.mxu0 0.0
    %743 = vmatpush2.msra.mxu0 0.0
    %744 = vmatprep.subr.mxu0 0.0
    %745 = vmatpush2.msra.mxu0 0.0
    %746 = vmatprep.subr.mxu0 0.0
    %747 = vmatpush2.msra.mxu0 0.0
    %748 = vmatprep.subr.mxu0 0.0
    %749 = vmatpush2.msra.mxu0 0.0
    %750 = vmatprep.subr.mxu0 0.0
    %751 = vmatpush2.msra.mxu0 0.0
    %752 = vmatprep.subr.mxu0 0.0
    %753 = vmatpush2.msra.mxu0 0.0
    %754 = vmatprep.subr.mxu0 0.0
    %755 = vmatpush2.msra.mxu0 0.0
    %756 = vmatprep.subr.mxu0 0.0
    %757 = vmatpush2.msra.mxu0 0.0
    %758 = vmatprep.subr.mxu0 0.0
    %759 = vmatpush2.msra.mxu0 0.0
    %760 = vmatprep.subr.mxu0 0.0
    %761 = vmatpush2.msra.mxu0 0.0
    %762 = vmatprep.subr.mxu0 0.0
    %763 = vmatpush2.msra.mxu0 0.0
    %764 = vmatprep.mubr.f32.mxu0 0.0
    %765 = vmatmul.mubr.f32.gmra.mxu0 %v485
    %v766 = vpop.f32.mrf.mxu0
    %v767 = vadd.f32 %v475, %v766
    %v768 = vpop.f32.mrf.mxu0
    %769 = vdwg.mxu0
    %v770 = vmul.f32 %v554, 0.5
    %v771 = vmul.f32 %v556, 0.5
    %v772 = vmul.f32 %v625, 0.5
    %v773 = vmul.f32 %v627, 0.5
    %v774 = vmul.f32 %v696, 0.5
    %v775 = vmul.f32 %v698, 0.5
    %v776 = vmul.f32 %v767, 0.5
    %v777 = vtanh.pop %v770
    %v778 = vtanh.pop %v771
    %v779 = vtanh.pop %v772
    %v780 = vtanh.pop %v773
    %v781 = vtanh.pop %v774
    %v782 = vtanh.pop %v775
    %v783 = vtanh.pop %v776
    %v784 = vmul.f32 %v777, 0.5
    %v785 = vmul.f32 %v778, 0.5
    %v786 = vmul.f32 %v779, 0.5
    %v787 = vmul.f32 %v780, 0.5
    %v788 = vmul.f32 %v781, 0.5
    %v789 = vmul.f32 %v782, 0.5
    %v790 = vmul.f32 %v783, 0.5
    %v791 = vadd.f32 %v784, 0.5
    %v792 = vadd.f32 %v785, 0.5
    %v793 = vadd.f32 %v786, 0.5
    %v794 = vadd.f32 %v787, 0.5
    %v795 = vadd.f32 %v788, 0.5
    %v796 = vadd.f32 %v789, 0.5
    %v797 = vadd.f32 %v790, 0.5
    %798 = vst [vmem:[#allocation2] sm:$0xff] %v791
    %799 = vst [vmem:[#allocation2 + $0x8] sm:$0xff] %v792
    %800 = vst [vmem:[#allocation2 + $0x10] sm:$0xff] %v793
    %801 = vst [vmem:[#allocation2 + $0x18] sm:$0xff] %v794
    %802 = vst [vmem:[#allocation2 + $0x20] sm:$0xff] %v795
    %803 = vst [vmem:[#allocation2 + $0x28] sm:$0xff] %v796
    %804 = vst.msk [vmem:[#allocation2 + $0x30] sm:$0xff] %vm133, %v797
    // Predicated region
    $region22: #{tpu_custom_call.1} parent=1 // pred_check
      _
    $region23: #{tpu_custom_call.1} parent=1 // pred_check_branch
      %806 = sbr.rel (0) target = $region25
    $region24: #{tpu_custom_call.1} parent=1 // pred_region
      %s808 = ssub.s32 896, 896
      %809 = vsyncadd [#allocation3], %s808
      %s811 = sshll.u32 [#allocation2], 4
      %s812 = int_to_ptr.vmem [resolvable:$true] %s811
      %814 = dma.vmem_to_hbm [thread:$0]  %s812, 896, %s5, [#allocation3]
    $region25: #{tpu_custom_call.1} parent=1 // pred_fallthru
      _
    // Predicated region
    $region26: #{tpu_custom_call.1} parent=1 // pred_check
      _
    $region27: #{tpu_custom_call.1} parent=1 // pred_check_branch
      %816 = sbr.rel (0) target = $region29
    $region28: #{tpu_custom_call.1} parent=1 // pred_region
      %817 = dma.done [#allocation3], 896
    $region29: #{tpu_custom_call.1} parent=1 // pred_fallthru
      _
    %818 = vsyncpa [#allocation3], 1

</llo_original>
